<compile_context>
chip_gen: v7x
topology: tpu7x:2x2x1
jax: 0.10.0
libtpu: 0.0.40
codegen_flags: <defaults>
</compile_context>

<pallas_src>
import functools

import jax
import jax.numpy as jnp
from jax.experimental import pallas as pl
from jax.experimental.pallas import tpu as pltpu


def _dma_flatten_kernel(x_ref, o_ref, sems, *, chunks):
    """Copy the (B, D) slab HBM->HBM as a few concurrent DMAs."""
    copies = []
    for idx, (start, size) in enumerate(chunks):   # static Python loop
        cp = pltpu.make_async_copy(
            x_ref.at[pl.ds(start, size), :],
            o_ref.at[pl.ds(start, size), :],
            sems.at[idx],
        )
        cp.start()
        copies.append(cp)
    for cp in copies:                              # wait only after all started
        cp.wait()


def _row_chunks(num_rows, row_bytes, target_bytes, max_chunks):
    """Static (start, size) row chunks of ~target_bytes each (ragged OK)."""
    want = -(-(num_rows * row_bytes) // target_bytes)   # ceil-div
    n = max(1, min(max_chunks, num_rows, want))
    base, rem = divmod(num_rows, n)
    chunks, start = [], 0
    for i in range(n):
        size = base + (1 if i < rem else 0)
        chunks.append((start, size))
        start += size
    return tuple(chunks)


def flatten_layer(x, *, target_chunk_bytes=8 * 1024 * 1024, max_chunks=4):
    """Pallas equivalent of FlattenLayer.forward: x.view(x.shape[0], -1)."""
    B = x.shape[0]
    D = 1
    for s in x.shape[1:]:
        D *= s
    itemsize = jnp.dtype(x.dtype).itemsize

    # Metadata-only, row-major: element order is identical to torch's
    # contiguous .view(B, -1).
    x2 = jnp.reshape(x, (B, D))

    chunks = _row_chunks(B, D * itemsize, target_chunk_bytes, max_chunks)
    kernel = functools.partial(_dma_flatten_kernel, chunks=chunks)

    return pl.pallas_call(
        kernel,
        out_shape=jax.ShapeDtypeStruct((B, D), x.dtype),
        in_specs=[pl.BlockSpec(memory_space=pl.ANY)],   # input stays in HBM
        out_specs=pl.BlockSpec(memory_space=pl.ANY),    # output allocated in HBM
        scratch_shapes=[pltpu.SemaphoreType.DMA((len(chunks),))],
        cost_estimate=pl.CostEstimate(
            flops=0, transcendentals=0, bytes_accessed=2 * B * D * itemsize),
    )(x2)


if __name__ == "__main__":
    key = jax.random.PRNGKey(0)

    # Small NCHW input consistent with a conv-net feature map.
    x = jax.random.normal(key, (2, 4, 16, 16), dtype=jnp.float32)
    y = flatten_layer(x)
    jax.block_until_ready(y)

    expected = jnp.reshape(x, (x.shape[0], -1))
    assert y.shape == (2, 4 * 16 * 16), y.shape
    assert y.dtype == x.dtype
    assert bool(jnp.all(y == expected))

    # Awkward shape (B not a multiple of 8, D not a multiple of 128): handled
    # by the same HBM->HBM DMA path, no fallback / VMEM cliff.
    x_odd = jax.random.normal(jax.random.PRNGKey(1), (3, 5, 7, 11),
                              dtype=jnp.float32)
    y_odd = flatten_layer(x_odd)
    jax.block_until_ready(y_odd)
    assert bool(jnp.all(y_odd == jnp.reshape(x_odd, (3, -1))))

    # Force the multi-chunk (concurrent DMA) path with a tiny chunk budget.
    x_big = jax.random.normal(jax.random.PRNGKey(2), (16, 8, 8, 8),
                              dtype=jnp.bfloat16)
    y_big = flatten_layer(x_big, target_chunk_bytes=1024)
    jax.block_until_ready(y_big)
    assert bool(jnp.all(y_big == jnp.reshape(x_big, (16, -1))))

    print("KERNEL_OK")
</pallas_src>

<mosaic_0001>
module attributes {stable_mosaic.version = 11 : i64} {
  func.func @_dma_flatten_kernel(%arg0: memref<2x1024xf32, #tpu.memory_space<any>>, %arg1: memref<2x1024xf32, #tpu.memory_space<any>>, %arg2: memref<1x!tpu.dma_semaphore, #tpu.memory_space<semaphore_mem>>) attributes {dimension_semantics = [], scalar_prefetch = 0 : i64, scratch_operands = 1 : i64, tpu.core_type = #tpu.core_type<tc>} {
    %c0_i32 = arith.constant 0 : i32
    %c0_i32_0 = arith.constant 0 : i32
    %c0_i32_1 = arith.constant 0 : i32
    %0 = tpu.memref_slice %arg0[%c0_i32_0, %c0_i32_1] : memref<2x1024xf32, #tpu.memory_space<any>> -> memref<2x1024xf32, #tpu.memory_space<any>>
    %c0_i32_2 = arith.constant 0 : i32
    %c0_i32_3 = arith.constant 0 : i32
    %1 = tpu.memref_slice %arg1[%c0_i32_2, %c0_i32_3] : memref<2x1024xf32, #tpu.memory_space<any>> -> memref<2x1024xf32, #tpu.memory_space<any>>
    %2 = tpu.memref_slice %arg2[%c0_i32] : memref<1x!tpu.dma_semaphore, #tpu.memory_space<semaphore_mem>> -> memref<1x!tpu.dma_semaphore, #tpu.memory_space<semaphore_mem>>
    %3 = tpu.memref_squeeze %2 : memref<1x!tpu.dma_semaphore, #tpu.memory_space<semaphore_mem>> -> memref<!tpu.dma_semaphore, #tpu.memory_space<semaphore_mem>>
    tpu.enqueue_dma source(%0 : memref<2x1024xf32, #tpu.memory_space<any>>) target(%1 : memref<2x1024xf32, #tpu.memory_space<any>>) target_semaphore(%3 : memref<!tpu.dma_semaphore, #tpu.memory_space<semaphore_mem>>)
    %c0_i32_4 = arith.constant 0 : i32
    %c0_i32_5 = arith.constant 0 : i32
    %c0_i32_6 = arith.constant 0 : i32
    %4 = tpu.memref_slice %arg0[%c0_i32_5, %c0_i32_6] : memref<2x1024xf32, #tpu.memory_space<any>> -> memref<2x1024xf32, #tpu.memory_space<any>>
    %c0_i32_7 = arith.constant 0 : i32
    %c0_i32_8 = arith.constant 0 : i32
    %5 = tpu.memref_slice %arg1[%c0_i32_7, %c0_i32_8] : memref<2x1024xf32, #tpu.memory_space<any>> -> memref<2x1024xf32, #tpu.memory_space<any>>
    %6 = tpu.memref_slice %arg2[%c0_i32_4] : memref<1x!tpu.dma_semaphore, #tpu.memory_space<semaphore_mem>> -> memref<1x!tpu.dma_semaphore, #tpu.memory_space<semaphore_mem>>
    %7 = tpu.memref_squeeze %6 : memref<1x!tpu.dma_semaphore, #tpu.memory_space<semaphore_mem>> -> memref<!tpu.dma_semaphore, #tpu.memory_space<semaphore_mem>>
    tpu.wait_dma2 semaphore(%7 : memref<!tpu.dma_semaphore, #tpu.memory_space<semaphore_mem>>) src(%4 : memref<2x1024xf32, #tpu.memory_space<any>>) dst(%5 : memref<2x1024xf32, #tpu.memory_space<any>>)
    return
  }
}

</mosaic_0001>

<llo_original>
// kernel: tpu_custom_call.1
$region0: #{tpu_custom_call.1}
  #allocation0 [shape = 'u32[]', space=smem, size = 0x4, offset = 0x4, fixed_abs, tag = 'smem constant byte address 0x4 - core index']
  #allocation1 [shape = 'u32[144,128]{1,0:T(1,128)}', space=vmem, size = 0x12000, scoped, tag = 'internal scratch']
  #allocation2 [shape = 's32[1]{0}', space=sflag, size = 0x4, scoped, tag = 'scratch operand']
  #allocation3 [shape = 's32[]', space=sflag, size = 0x4, offset = 0, fixed_abs, tag = 'sflag constant byte address 0x0 - dummy sync flag']
  #allocation4 [shape = 'u32[0]{0}', space=smem, size = 0, offset = 0, fixed_abs, tag = 'smem constant byte address 0x0 - null']
  %s0 = inlined_call_operand.hbm [shape: f32[2,1024], index: 0, kind: input, shape index: {}]
  %s1 = inlined_call_operand.hbm [shape: f32[2,1024], index: 1, kind: output, shape index: {}]
  %s2 = sld [smem:[#allocation0]]
  $region2: #{tpu_custom_call.1} parent=0
    _
  %s4 = ssub.s32 1, %s2
  %s5 = scalar_select 0, %s4, %s2
  %s7 = sshll.u32 1, 14
  %s8 = sxor.u32 4294967295, %s7
  %s11 = sshll.u32 3, 24
  %s12 = sxor.u32 4294967295, %s11
  %s13 = sand.u32 0, %s12
  %s15 = sor.u32 %s13, 0
  %18 = dma.general %s0, 256, %s1, [#allocation2], [#allocation3], [#allocation4], %s15, 0
  %s19 = smul.u32 2, 1
  %s20 = smul.u32 %s19, 8
  %s21 = sshll.u32 %s20, 4
  %22 = dma.done [#allocation2], %s21
  %23 = vsyncmov [#allocation2]
  %s24 = vpop.sfrf %23
  %p25 = scmp.eq.s32.totalorder %s24, 0
  %p26 = pneg %p25
  %28 = shalt.err (%p26)

</llo_original>
